<compile_context>
chip_gen: v7x
topology: tpu7x:2x2x1
jax: 0.10.0
libtpu: 0.0.40
codegen_flags: <defaults>
</compile_context>

<pallas_src>
import functools
import math

import jax
import jax.numpy as jnp
from jax import lax
from jax.experimental import pallas as pl
from jax.experimental.pallas import tpu as pltpu


def _round_up(x, m):
    return ((x + m - 1) // m) * m


def _ar_linear_kernel(x_ref, w_ref, b_ref, o_ref, acc_ref, *, tk, tn):
    j = pl.program_id(1)   # N (output-feature) tile index
    k = pl.program_id(2)   # K (input-feature / reduction) tile index
    nk = pl.num_programs(2)

    @pl.when(k == 0)
    def _init():
        acc_ref[...] = jnp.zeros_like(acc_ref)

    row_start = k * tk     # global row offset of this weight tile
    col_start = j * tn     # global col offset of this weight tile

    # tril(-1) keeps entries with row > col.
    #   fully_zero : every row <= every col  -> tile is all zeros, skip matmul
    #   fully_dense: every row >  every col  -> no masking needed
    #   straddles  : tile crosses the diagonal -> mask with iota compare
    fully_zero = (row_start + tk - 1) <= col_start
    fully_dense = row_start >= (col_start + tn)
    straddles = jnp.logical_and(jnp.logical_not(fully_zero),
                                jnp.logical_not(fully_dense))

    @pl.when(fully_dense)
    def _dense():
        acc_ref[...] += jnp.dot(x_ref[...], w_ref[...],
                                preferred_element_type=jnp.float32)

    @pl.when(straddles)
    def _diag():
        w = w_ref[...]
        rows = row_start + lax.broadcasted_iota(jnp.int32, w.shape, 0)
        cols = col_start + lax.broadcasted_iota(jnp.int32, w.shape, 1)
        w_masked = jnp.where(rows > cols, w, jnp.zeros_like(w))
        acc_ref[...] += jnp.dot(x_ref[...], w_masked,
                                preferred_element_type=jnp.float32)

    @pl.when(k == nk - 1)
    def _finalize():
        out = acc_ref[...] + b_ref[...].astype(jnp.float32)
        o_ref[...] = out.astype(o_ref.dtype)


def _default_tiles(batch, in_size, out_size):
    # Lane-dense output: tn multiple of 128; tm multiple of 8; tk multiple of 128.
    tm = min(256, _round_up(batch, 8))
    tn = min(512, _round_up(out_size, 128))
    tk = min(512, _round_up(in_size, 128))
    return tm, tn, tk


def autoregressive_linear(x, weight, bias, *, tm=None, tn=None, tk=None):
    """x: [B, in_size], weight: [in_size, out_size], bias: [out_size] -> [B, out_size]."""
    B, in_size = x.shape
    in_size_w, out_size = weight.shape
    assert in_size == in_size_w

    dtm, dtn, dtk = _default_tiles(B, in_size, out_size)
    tm = dtm if tm is None else tm
    tn = dtn if tn is None else tn
    tk = dtk if tk is None else tk

    # Pad everything to tile multiples (zeros do not change the result; the
    # padded output rows/cols are sliced off below).
    Bp = _round_up(B, tm)
    Kp = _round_up(in_size, tk)
    Np = _round_up(out_size, tn)

    x_p = jnp.pad(x, ((0, Bp - B), (0, Kp - in_size)))
    w_p = jnp.pad(weight, ((0, Kp - in_size), (0, Np - out_size)))
    b_p = jnp.pad(bias.reshape(1, out_size), ((0, 0), (0, Np - out_size)))

    grid = (Bp // tm, Np // tn, Kp // tk)
    kernel = functools.partial(_ar_linear_kernel, tk=tk, tn=tn)

    out_p = pl.pallas_call(
        kernel,
        out_shape=jax.ShapeDtypeStruct((Bp, Np), x.dtype),
        grid_spec=pltpu.PrefetchScalarGridSpec(
            num_scalar_prefetch=0,
            grid=grid,
            in_specs=[
                pl.BlockSpec((tm, tk), lambda i, j, k: (i, k)),   # x tile
                pl.BlockSpec((tk, tn), lambda i, j, k: (k, j)),   # weight tile
                pl.BlockSpec((1, tn), lambda i, j, k: (0, j)),    # bias tile
            ],
            out_specs=pl.BlockSpec((tm, tn), lambda i, j, k: (i, j)),
            scratch_shapes=[pltpu.VMEM((tm, tn), jnp.float32)],
        ),
        compiler_params=pltpu.CompilerParams(
            dimension_semantics=("parallel", "parallel", "arbitrary"),
        ),
    )(x_p, w_p, b_p)

    return out_p[:B, :out_size]


def init_params(key, in_size, out_size):
    """Deterministic re-implementation of AutoregressiveLinear.reset_parameters."""
    kw, kb = jax.random.split(key)
    # xavier_normal_: std = sqrt(2 / (fan_in + fan_out))
    std = math.sqrt(2.0 / (in_size + out_size))
    weight = jax.random.normal(kw, (in_size, out_size), dtype=jnp.float32) * std
    stdv = 1.0 / math.sqrt(out_size)
    bias = jax.random.uniform(kb, (out_size,), dtype=jnp.float32,
                              minval=-stdv, maxval=stdv)
    return weight, bias


def _reference(x, weight, bias):
    in_size, out_size = weight.shape
    mask = jnp.tril(jnp.ones((in_size, out_size), dtype=bool), k=-1)
    w_masked = jnp.where(mask, weight, 0.0)
    return jnp.dot(x, w_masked, precision=lax.Precision.HIGHEST) + bias


if __name__ == "__main__":
    key = jax.random.PRNGKey(0)

    # --- small shape, matches the module's toy usage ---------------------
    k_x, k_p, k_x2, k_p2 = jax.random.split(key, 4)
    batch, in_size, out_size = 8, 32, 32
    x = jax.random.normal(k_x, (batch, in_size), dtype=jnp.float32)
    weight, bias = init_params(k_p, in_size, out_size)

    out = autoregressive_linear(x, weight, bias)
    out = jax.block_until_ready(out)
    ref = _reference(x, weight, bias)
    assert out.shape == ref.shape
    assert jnp.allclose(out, ref, atol=1e-3, rtol=1e-3), "mismatch vs reference (small)"

    # --- moderate shape: exercises multi-tile grid + tril tile skipping ---
    batch2, in2, out2 = 64, 256, 384
    x2 = jax.random.normal(k_x2, (batch2, in2), dtype=jnp.float32)
    weight2, bias2 = init_params(k_p2, in2, out2)

    out2_v = autoregressive_linear(x2, weight2, bias2, tm=64, tn=128, tk=128)
    out2_v = jax.block_until_ready(out2_v)
    ref2 = _reference(x2, weight2, bias2)
    assert out2_v.shape == ref2.shape
    assert jnp.allclose(out2_v, ref2, atol=1e-3, rtol=1e-3), "mismatch vs reference (tiled)"

    print("KERNEL_OK")
</pallas_src>

<mosaic_0001>
module attributes {stable_mosaic.version = 11 : i64} {
  func.func @_ar_linear_kernel(%arg0: i32, %arg1: i32, %arg2: i32, %arg3: memref<8x128xf32, #tpu.memory_space<vmem>>, %arg4: memref<128x128xf32, #tpu.memory_space<vmem>>, %arg5: memref<1x128xf32, #tpu.memory_space<vmem>>, %arg6: memref<8x128xf32, #tpu.memory_space<vmem>>, %arg7: memref<8x128xf32, #tpu.memory_space<vmem>>) attributes {dimension_semantics = [#tpu.dimension_semantics<parallel>, #tpu.dimension_semantics<parallel>, #tpu.dimension_semantics<arbitrary>], iteration_bounds = array<i64: 1, 1, 1>, scalar_prefetch = 0 : i64, scratch_operands = 1 : i64, tpu.core_type = #tpu.core_type<tc>, window_params = [{transform_indices = @transform_0, window_bounds = array<i64: 8, 128>}, {transform_indices = @transform_1, window_bounds = array<i64: 128, 128>}, {transform_indices = @transform_2, window_bounds = array<i64: 1, 128>}, {transform_indices = @transform_3, window_bounds = array<i64: 8, 128>}]} {
    %c0_i32 = arith.constant 0 : i32
    %0 = arith.cmpi eq, %arg2, %c0_i32 : i32
    %1 = arith.extui %0 : i1 to i32
    %c0_i32_0 = arith.constant 0 : i32
    %2 = arith.cmpi ne, %1, %c0_i32_0 : i32
    scf.if %2 {
      %cst = arith.constant 0.000000e+00 : f32
      %20 = vector.broadcast %cst : f32 to vector<8x128xf32>
      %c0 = arith.constant 0 : index
      %c0_9 = arith.constant 0 : index
      %21 = vector.load %arg7[%c0, %c0_9] : memref<8x128xf32, #tpu.memory_space<vmem>>, vector<8x128xf32>
      tpu.vector_store %arg7[%c0, %c0_9], %20 {strides = array<i32>} : memref<8x128xf32, #tpu.memory_space<vmem>>, vector<8x128xf32>,
    } else {
    }
    %c128_i32 = arith.constant 128 : i32
    %3 = arith.muli %arg2, %c128_i32 : i32
    %c128_i32_1 = arith.constant 128 : i32
    %4 = arith.muli %arg1, %c128_i32_1 : i32
    %c128_i32_2 = arith.constant 128 : i32
    %5 = arith.addi %3, %c128_i32_2 : i32
    %c1_i32 = arith.constant 1 : i32
    %6 = arith.subi %5, %c1_i32 : i32
    %7 = arith.cmpi sle, %6, %4 : i32
    %c128_i32_3 = arith.constant 128 : i32
    %8 = arith.addi %4, %c128_i32_3 : i32
    %9 = arith.cmpi sge, %3, %8 : i32
    %true = arith.constant true
    %10 = arith.xori %7, %true : i1
    %true_4 = arith.constant true
    %11 = arith.xori %9, %true_4 : i1
    %12 = arith.andi %10, %11 : i1
    %13 = arith.extui %9 : i1 to i32
    %c0_i32_5 = arith.constant 0 : i32
    %14 = arith.cmpi ne, %13, %c0_i32_5 : i32
    scf.if %14 {
      %c0 = arith.constant 0 : index
      %c0_9 = arith.constant 0 : index
      %20 = vector.load %arg7[%c0, %c0_9] : memref<8x128xf32, #tpu.memory_space<vmem>>, vector<8x128xf32>
      %c0_10 = arith.constant 0 : index
      %c0_11 = arith.constant 0 : index
      %21 = vector.load %arg3[%c0_10, %c0_11] : memref<8x128xf32, #tpu.memory_space<vmem>>, vector<8x128xf32>
      %c0_12 = arith.constant 0 : index
      %c0_13 = arith.constant 0 : index
      %22 = vector.load %arg4[%c0_12, %c0_13] : memref<128x128xf32, #tpu.memory_space<vmem>>, vector<128x128xf32>
      %cst = arith.constant dense<0.000000e+00> : vector<8x128xf32>
      %23 = tpu.matmul %21, %22, %cst {dimension_numbers = #tpu.dot_dimension_numbers<[1], [0], [0], [1], [0, 0, 1, 1], [], []>} : vector<8x128xf32>, vector<128x128xf32>, vector<8x128xf32> -> vector<8x128xf32>
      %24 = arith.addf %20, %23 : vector<8x128xf32>
      %c0_14 = arith.constant 0 : index
      %c0_15 = arith.constant 0 : index
      %25 = vector.load %arg7[%c0_14, %c0_15] : memref<8x128xf32, #tpu.memory_space<vmem>>, vector<8x128xf32>
      tpu.vector_store %arg7[%c0_14, %c0_15], %24 {strides = array<i32>} : memref<8x128xf32, #tpu.memory_space<vmem>>, vector<8x128xf32>,
    } else {
    }
    %15 = arith.extui %12 : i1 to i32
    %c0_i32_6 = arith.constant 0 : i32
    %16 = arith.cmpi ne, %15, %c0_i32_6 : i32
    scf.if %16 {
      %c0 = arith.constant 0 : index
      %c0_9 = arith.constant 0 : index
      %20 = vector.load %arg4[%c0, %c0_9] : memref<128x128xf32, #tpu.memory_space<vmem>>, vector<128x128xf32>
      %21 = tpu.iota {dimensions = array<i32: 0>} : vector<128x128xi32>
      %22 = vector.broadcast %3 : i32 to vector<128x128xi32>
      %23 = arith.addi %22, %21 : vector<128x128xi32>
      %24 = tpu.iota {dimensions = array<i32: 1>} : vector<128x128xi32>
      %25 = vector.broadcast %4 : i32 to vector<128x128xi32>
      %26 = arith.addi %25, %24 : vector<128x128xi32>
      %27 = arith.cmpi sgt, %23, %26 : vector<128x128xi32>
      %cst = arith.constant 0.000000e+00 : f32
      %28 = vector.broadcast %cst : f32 to vector<128x128xf32>
      %29 = arith.select %27, %20, %28 : vector<128x128xi1>, vector<128x128xf32>
      %c0_10 = arith.constant 0 : index
      %c0_11 = arith.constant 0 : index
      %30 = vector.load %arg7[%c0_10, %c0_11] : memref<8x128xf32, #tpu.memory_space<vmem>>, vector<8x128xf32>
      %c0_12 = arith.constant 0 : index
      %c0_13 = arith.constant 0 : index
      %31 = vector.load %arg3[%c0_12, %c0_13] : memref<8x128xf32, #tpu.memory_space<vmem>>, vector<8x128xf32>
      %cst_14 = arith.constant dense<0.000000e+00> : vector<8x128xf32>
      %32 = tpu.matmul %31, %29, %cst_14 {dimension_numbers = #tpu.dot_dimension_numbers<[1], [0], [0], [1], [0, 0, 1, 1], [], []>} : vector<8x128xf32>, vector<128x128xf32>, vector<8x128xf32> -> vector<8x128xf32>
      %33 = arith.addf %30, %32 : vector<8x128xf32>
      %c0_15 = arith.constant 0 : index
      %c0_16 = arith.constant 0 : index
      %34 = vector.load %arg7[%c0_15, %c0_16] : memref<8x128xf32, #tpu.memory_space<vmem>>, vector<8x128xf32>
      tpu.vector_store %arg7[%c0_15, %c0_16], %33 {strides = array<i32>} : memref<8x128xf32, #tpu.memory_space<vmem>>, vector<8x128xf32>,
    } else {
    }
    %c0_i32_7 = arith.constant 0 : i32
    %17 = arith.cmpi eq, %arg2, %c0_i32_7 : i32
    %18 = arith.extui %17 : i1 to i32
    %c0_i32_8 = arith.constant 0 : i32
    %19 = arith.cmpi ne, %18, %c0_i32_8 : i32
    scf.if %19 {
      %c0 = arith.constant 0 : index
      %c0_9 = arith.constant 0 : index
      %20 = vector.load %arg7[%c0, %c0_9] : memref<8x128xf32, #tpu.memory_space<vmem>>, vector<8x128xf32>
      %c0_10 = arith.constant 0 : index
      %c0_11 = arith.constant 0 : index
      %21 = vector.load %arg5[%c0_10, %c0_11] : memref<1x128xf32, #tpu.memory_space<vmem>>, vector<1x128xf32>
      %22 = vector.broadcast %21 : vector<1x128xf32> to vector<8x128xf32>
      %23 = arith.addf %20, %22 : vector<8x128xf32>
      %c0_12 = arith.constant 0 : index
      %c0_13 = arith.constant 0 : index
      %24 = vector.load %arg6[%c0_12, %c0_13] : memref<8x128xf32, #tpu.memory_space<vmem>>, vector<8x128xf32>
      tpu.vector_store %arg6[%c0_12, %c0_13], %23 {strides = array<i32>} : memref<8x128xf32, #tpu.memory_space<vmem>>, vector<8x128xf32>,
    } else {
    }
    return
  }
  func.func @transform_0(%arg0: i32, %arg1: i32, %arg2: i32) -> (i32, i32) {
    %c0_i32 = arith.constant 0 : i32
    return %arg0, %arg2 : i32, i32
  }
  func.func @transform_1(%arg0: i32, %arg1: i32, %arg2: i32) -> (i32, i32) {
    %c0_i32 = arith.constant 0 : i32
    return %arg2, %arg1 : i32, i32
  }
  func.func @transform_2(%arg0: i32, %arg1: i32, %arg2: i32) -> (i32, i32) {
    %c0_i32 = arith.constant 0 : i32
    %c0_i32_0 = arith.constant 0 : i32
    return %c0_i32, %arg1 : i32, i32
  }
  func.func @transform_3(%arg0: i32, %arg1: i32, %arg2: i32) -> (i32, i32) {
    %c0_i32 = arith.constant 0 : i32
    return %arg0, %arg1 : i32, i32
  }
}

</mosaic_0001>

<llo_original>
// kernel: tpu_custom_call.1
$region0: #{tpu_custom_call.1}
  #allocation0 [shape = 'u32[]', space=smem, size = 0x4, offset = 0x4, fixed_abs, tag = 'smem constant byte address 0x4 - core index']
  #allocation1 [shape = 'u32[144,128]{1,0:T(1,128)}', space=vmem, size = 0x12000, scoped, tag = 'internal scratch']
  #allocation2 [shape = 'f32[8,128]{1,0:T(8,128)}', space=vmem, size = 0x1000, scoped, tag = 'scratch operand']
  %s0 = inlined_call_operand.hbm [shape: f32[8,128], index: 0, kind: input, shape index: {}]
  %s1 = inlined_call_operand.hbm [shape: f32[128,128], index: 1, kind: input, shape index: {}]
  %s2 = inlined_call_operand.vmem [shape: f32[1,128], index: 2, kind: input, shape index: {}]
  %s3 = inlined_call_operand.hbm [shape: f32[8,128], index: 3, kind: output, shape index: {}]
  %s4 = sld [smem:[#allocation0]]
  $region46: #{tpu_custom_call.1} parent=0
    _
  %s6 = ssub.s32 1, %s4
  %s7 = scalar_select 0, %s6, %s4
  $region1: #{tpu_custom_call.1} parent=0
    #allocation3 [shape = 'u8[4096]{0}', space=vmem, size = 0x1000, scoped, tag = 'input window, operand 0, single buffered']
    #allocation4 [shape = 's32[1]{0}', space=sflag, size = 0x4, scoped, tag = 'scoped memory for tpu_custom_call.1']
    #allocation5 [shape = 's32[1]{0}', space=sflag, size = 0x4, scoped, tag = 'scoped memory for tpu_custom_call.1']
    #allocation6 [shape = 'u8[65536]{0}', space=vmem, size = 0x10000, scoped, tag = 'input window, operand 1, single buffered']
    #allocation7 [shape = 's32[1]{0}', space=sflag, size = 0x4, scoped, tag = 'scoped memory for tpu_custom_call.1']
    #allocation8 [shape = 'u8[4096]{0}', space=vmem, size = 0x1000, scoped, tag = 'output window, operand 0, single buffered']
    %8 = vsyncpa [#allocation4], 0
    %9 = vsyncpa [#allocation7], 0
    %10 = vsyncpa [#allocation5], 0
    // Predicated region
    $region2: #{tpu_custom_call.1} parent=1 // pred_check
      _
    $region3: #{tpu_custom_call.1} parent=1 // pred_check_branch
      %12 = sbr.rel (0) target = $region5
    $region4: #{tpu_custom_call.1} parent=1 // pred_region
      %s14 = ssub.s32 128, 128
      %15 = vsyncadd [#allocation4], %s14
      %s17 = sshll.u32 [#allocation3], 4
      %s18 = int_to_ptr.vmem [resolvable:$true] %s17
      %20 = dma.hbm_to_vmem [thread:$0]  %s0, 128, %s18, [#allocation4]
    $region5: #{tpu_custom_call.1} parent=1 // pred_fallthru
      _
    // Predicated region
    $region6: #{tpu_custom_call.1} parent=1 // pred_check
      _
    $region7: #{tpu_custom_call.1} parent=1 // pred_check_branch
      %22 = sbr.rel (0) target = $region9
    $region8: #{tpu_custom_call.1} parent=1 // pred_region
      %s24 = ssub.s32 2048, 2048
      %25 = vsyncadd [#allocation7], %s24
      %s26 = sshll.u32 [#allocation6], 4
      %s27 = int_to_ptr.vmem [resolvable:$true] %s26
      %32 = dma.hbm_to_vmem [thread:$0]  %s1, 2048, %s27, [#allocation7], 128, 128, 8
    $region9: #{tpu_custom_call.1} parent=1 // pred_fallthru
      _
    // Predicated region
    $region10: #{tpu_custom_call.1} parent=1 // pred_check
      _
    $region11: #{tpu_custom_call.1} parent=1 // pred_check_branch
      %34 = sbr.rel (0) target = $region13
    $region12: #{tpu_custom_call.1} parent=1 // pred_region
      _
    $region13: #{tpu_custom_call.1} parent=1 // pred_fallthru
      _
    // Predicated region
    $region14: #{tpu_custom_call.1} parent=1 // pred_check
      _
    $region15: #{tpu_custom_call.1} parent=1 // pred_check_branch
      %36 = sbr.rel (0) target = $region17
    $region16: #{tpu_custom_call.1} parent=1 // pred_region
      %37 = dma.done [#allocation4], 128
    $region17: #{tpu_custom_call.1} parent=1 // pred_fallthru
      _
    // Predicated region
    $region18: #{tpu_custom_call.1} parent=1 // pred_check
      _
    $region19: #{tpu_custom_call.1} parent=1 // pred_check_branch
      %39 = sbr.rel (0) target = $region21
    $region20: #{tpu_custom_call.1} parent=1 // pred_region
      %40 = dma.done [#allocation7], 2048
    $region21: #{tpu_custom_call.1} parent=1 // pred_fallthru
      _
    %p41 = scmp.eq.s32.totalorder 0, 0
    // Predicated region
    $region22: #{tpu_custom_call.1} parent=1 // pred_check
      %p42 = pneg %p41
    $region23: #{tpu_custom_call.1} parent=1 // pred_check_branch
      %44 = sbr.rel (%p42) target = $region25
    $region24: #{tpu_custom_call.1} parent=1 // pred_region
      %45 = vst [vmem:[#allocation2] sm:$0xff] 0.0
    $region25: #{tpu_custom_call.1} parent=1 // pred_fallthru
      _
    %s46 = smul.u32 0, 128
    %s47 = smul.u32 0, 128
    %s48 = sadd.s32 %s46, 127
    %s49 = sadd.s32 %s47, 128
    %p50 = scmp.ge.s32.totalorder %s46, %s49
    %p51 = scmp.gt.s32.totalorder %s48, %s47
    %p52 = scmp.lt.s32.totalorder %s46, %s49
    %p53 = pnand %p51, %p52
    %p54 = pneg %p53
    // Predicated region
    $region26: #{tpu_custom_call.1} parent=1 // pred_check
      %p55 = pneg %p50
    $region27: #{tpu_custom_call.1} parent=1 // pred_check_branch
      %57 = sbr.rel (%p55) target = $region29
    $region28: #{tpu_custom_call.1} parent=1 // pred_region
      %v58 = vld [vmem:[#allocation2] sm:$0xff]
      %v59 = vld [vmem:[#allocation3] sm:$0xff]
      %v60 = vld [vmem:[#allocation6] sm:$0xff]
      %v61 = vld [vmem:[#allocation6 + $0x8] sm:$0xff]
      %v62 = vld [vmem:[#allocation6 + $0x10] sm:$0xff]
      %v63 = vld [vmem:[#allocation6 + $0x18] sm:$0xff]
      %v64 = vld [vmem:[#allocation6 + $0x20] sm:$0xff]
      %v65 = vld [vmem:[#allocation6 + $0x28] sm:$0xff]
      %v66 = vld [vmem:[#allocation6 + $0x30] sm:$0xff]
      %v67 = vld [vmem:[#allocation6 + $0x38] sm:$0xff]
      %v68 = vld [vmem:[#allocation6 + $0x40] sm:$0xff]
      %v69 = vld [vmem:[#allocation6 + $0x48] sm:$0xff]
      %v70 = vld [vmem:[#allocation6 + $0x50] sm:$0xff]
      %v71 = vld [vmem:[#allocation6 + $0x58] sm:$0xff]
      %v72 = vld [vmem:[#allocation6 + $0x60] sm:$0xff]
      %v73 = vld [vmem:[#allocation6 + $0x68] sm:$0xff]
      %v74 = vld [vmem:[#allocation6 + $0x70] sm:$0xff]
      %v75 = vld [vmem:[#allocation6 + $0x78] sm:$0xff]
      %76 = vmatprep.subr.mxu0 0.0
      %77 = vmatpush1.msra.mxu0 %v60
      %78 = vmatprep.subr.mxu0 0.0
      %79 = vmatpush1.msra.mxu0 %v61
      %80 = vmatprep.subr.mxu0 0.0
      %81 = vmatpush1.msra.mxu0 %v62
      %82 = vmatprep.subr.mxu0 0.0
      %83 = vmatpush1.msra.mxu0 %v63
      %84 = vmatprep.subr.mxu0 0.0
      %85 = vmatpush1.msra.mxu0 %v64
      %86 = vmatprep.subr.mxu0 0.0
      %87 = vmatpush1.msra.mxu0 %v65
      %88 = vmatprep.subr.mxu0 0.0
      %89 = vmatpush1.msra.mxu0 %v66
      %90 = vmatprep.subr.mxu0 0.0
      %91 = vmatpush1.msra.mxu0 %v67
      %92 = vmatprep.subr.mxu0 0.0
      %93 = vmatpush1.msra.mxu0 %v68
      %94 = vmatprep.subr.mxu0 0.0
      %95 = vmatpush1.msra.mxu0 %v69
      %96 = vmatprep.subr.mxu0 0.0
      %97 = vmatpush1.msra.mxu0 %v70
      %98 = vmatprep.subr.mxu0 0.0
      %99 = vmatpush1.msra.mxu0 %v71
      %100 = vmatprep.subr.mxu0 0.0
      %101 = vmatpush1.msra.mxu0 %v72
      %102 = vmatprep.subr.mxu0 0.0
      %103 = vmatpush1.msra.mxu0 %v73
      %104 = vmatprep.subr.mxu0 0.0
      %105 = vmatpush1.msra.mxu0 %v74
      %106 = vmatprep.subr.mxu0 0.0
      %107 = vmatpush1.msra.mxu0 %v75
      %108 = vmatprep.subr.mxu0 0.0
      %109 = vmatpush1.msra.mxu0 0.0
      %110 = vmatprep.subr.mxu0 0.0
      %111 = vmatpush1.msra.mxu0 0.0
      %112 = vmatprep.subr.mxu0 0.0
      %113 = vmatpush1.msra.mxu0 0.0
      %114 = vmatprep.subr.mxu0 0.0
      %115 = vmatpush1.msra.mxu0 0.0
      %116 = vmatprep.subr.mxu0 0.0
      %117 = vmatpush1.msra.mxu0 0.0
      %118 = vmatprep.subr.mxu0 0.0
      %119 = vmatpush1.msra.mxu0 0.0
      %120 = vmatprep.subr.mxu0 0.0
      %121 = vmatpush1.msra.mxu0 0.0
      %122 = vmatprep.subr.mxu0 0.0
      %123 = vmatpush1.msra.mxu0 0.0
      %124 = vmatprep.subr.mxu0 0.0
      %125 = vmatpush1.msra.mxu0 0.0
      %126 = vmatprep.subr.mxu0 0.0
      %127 = vmatpush1.msra.mxu0 0.0
      %128 = vmatprep.subr.mxu0 0.0
      %129 = vmatpush1.msra.mxu0 0.0
      %130 = vmatprep.subr.mxu0 0.0
      %131 = vmatpush1.msra.mxu0 0.0
      %132 = vmatprep.subr.mxu0 0.0
      %133 = vmatpush1.msra.mxu0 0.0
      %134 = vmatprep.subr.mxu0 0.0
      %135 = vmatpush1.msra.mxu0 0.0
      %136 = vmatprep.subr.mxu0 0.0
      %137 = vmatpush1.msra.mxu0 0.0
      %138 = vmatprep.subr.mxu0 0.0
      %139 = vmatpush1.msra.mxu0 0.0
      %140 = vmatprep.mubr.f32.mxu0 0.0
      %141 = vmatmul.mubr.f32.gmra.mrb[0].mxu0 %v59
      %v142 = vpop.f32.mrb[0].mxu0
      %v143 = vadd.f32 0.0, %v142
      %v144 = vpop.f32.mrb[0].mxu0
      %145 = vdwg.mxu0
      %v146 = vadd.f32 %v58, %v143
      %147 = vst [vmem:[#allocation2] sm:$0xff] %v146
    $region29: #{tpu_custom_call.1} parent=1 // pred_fallthru
      _
    // Predicated region
    $region30: #{tpu_custom_call.1} parent=1 // pred_check
      _
    $region31: #{tpu_custom_call.1} parent=1 // pred_check_branch
      %149 = sbr.rel (%p53) target = $region33
    $region32: #{tpu_custom_call.1} parent=1 // pred_region
      %v150 = vld [vmem:[#allocation6] sm:$0xff]
      %v151 = vld [vmem:[#allocation6 + $0x8] sm:$0xff]
      %v152 = vld [vmem:[#allocation6 + $0x10] sm:$0xff]
      %v153 = vld [vmem:[#allocation6 + $0x18] sm:$0xff]
      %v154 = vld [vmem:[#allocation6 + $0x20] sm:$0xff]
      %v155 = vld [vmem:[#allocation6 + $0x28] sm:$0xff]
      %v156 = vld [vmem:[#allocation6 + $0x30] sm:$0xff]
      %v157 = vld [vmem:[#allocation6 + $0x38] sm:$0xff]
      %v158 = vld [vmem:[#allocation6 + $0x40] sm:$0xff]
      %v159 = vld [vmem:[#allocation6 + $0x48] sm:$0xff]
      %v160 = vld [vmem:[#allocation6 + $0x50] sm:$0xff]
      %v161 = vld [vmem:[#allocation6 + $0x58] sm:$0xff]
      %v162 = vld [vmem:[#allocation6 + $0x60] sm:$0xff]
      %v163 = vld [vmem:[#allocation6 + $0x68] sm:$0xff]
      %v164 = vld [vmem:[#allocation6 + $0x70] sm:$0xff]
      %v165 = vld [vmem:[#allocation6 + $0x78] sm:$0xff]
      %v166 = vlaneseq
      %v167 = vshrl.u32 %v166, 7
      %v168 = vadd.s32 %v167, 8
      %v169 = vadd.s32 %v167, 16
      %v170 = vadd.s32 %v167, 24
      %v171 = vadd.s32 %v167, 32
      %v172 = vadd.s32 %v167, 40
      %v173 = vadd.s32 %v167, 48
      %v174 = vadd.s32 %v167, 56
      %v175 = vadd.s32 %v167, 64
      %v176 = vadd.s32 %v167, 72
      %v177 = vadd.s32 %v167, 80
      %v178 = vadd.s32 %v167, 88
      %v179 = vadd.s32 %v167, 96
      %v180 = vadd.s32 %v167, 104
      %v181 = vadd.s32 %v167, 112
      %v182 = vadd.s32 %v167, 120
      %v183 = vstv %s46
      %v184 = vadd.s32 %v183, %v167
      %v185 = vadd.s32 %v183, %v168
      %v186 = vadd.s32 %v183, %v169
      %v187 = vadd.s32 %v183, %v170
      %v188 = vadd.s32 %v183, %v171
      %v189 = vadd.s32 %v183, %v172
      %v190 = vadd.s32 %v183, %v173
      %v191 = vadd.s32 %v183, %v174
      %v192 = vadd.s32 %v183, %v175
      %v193 = vadd.s32 %v183, %v176
      %v194 = vadd.s32 %v183, %v177
      %v195 = vadd.s32 %v183, %v178
      %v196 = vadd.s32 %v183, %v179
      %v197 = vadd.s32 %v183, %v180
      %v198 = vadd.s32 %v183, %v181
      %v199 = vadd.s32 %v183, %v182
      %v200 = vlaneseq
      %v201 = vand.u32 %v200, 127
      %v202 = vstv %s47
      %v203 = vadd.s32 %v202, %v201
      %vm204 = vcmp.gt.s32.totalorder %v184, %v203
      %vm205 = vcmp.gt.s32.totalorder %v185, %v203
      %vm206 = vcmp.gt.s32.totalorder %v186, %v203
      %vm207 = vcmp.gt.s32.totalorder %v187, %v203
      %vm208 = vcmp.gt.s32.totalorder %v188, %v203
      %vm209 = vcmp.gt.s32.totalorder %v189, %v203
      %vm210 = vcmp.gt.s32.totalorder %v190, %v203
      %vm211 = vcmp.gt.s32.totalorder %v191, %v203
      %vm212 = vcmp.gt.s32.totalorder %v192, %v203
      %vm213 = vcmp.gt.s32.totalorder %v193, %v203
      %vm214 = vcmp.gt.s32.totalorder %v194, %v203
      %vm215 = vcmp.gt.s32.totalorder %v195, %v203
      %vm216 = vcmp.gt.s32.totalorder %v196, %v203
      %vm217 = vcmp.gt.s32.totalorder %v197, %v203
      %vm218 = vcmp.gt.s32.totalorder %v198, %v203
      %vm219 = vcmp.gt.s32.totalorder %v199, %v203
      %v220 = vsel %vm204, %v150, 0.0
      %v221 = vsel %vm205, %v151, 0.0
      %v222 = vsel %vm206, %v152, 0.0
      %v223 = vsel %vm207, %v153, 0.0
      %v224 = vsel %vm208, %v154, 0.0
      %v225 = vsel %vm209, %v155, 0.0
      %v226 = vsel %vm210, %v156, 0.0
      %v227 = vsel %vm211, %v157, 0.0
      %v228 = vsel %vm212, %v158, 0.0
      %v229 = vsel %vm213, %v159, 0.0
      %v230 = vsel %vm214, %v160, 0.0
      %v231 = vsel %vm215, %v161, 0.0
      %v232 = vsel %vm216, %v162, 0.0
      %v233 = vsel %vm217, %v163, 0.0
      %v234 = vsel %vm218, %v164, 0.0
      %v235 = vsel %vm219, %v165, 0.0
      %v236 = vld [vmem:[#allocation2] sm:$0xff]
      %v237 = vld [vmem:[#allocation3] sm:$0xff]
      %238 = vmatprep.subr.mxu0 0.0
      %239 = vmatpush1.msra.mxu0 %v220
      %240 = vmatprep.subr.mxu0 0.0
      %241 = vmatpush1.msra.mxu0 %v221
      %242 = vmatprep.subr.mxu0 0.0
      %243 = vmatpush1.msra.mxu0 %v222
      %244 = vmatprep.subr.mxu0 0.0
      %245 = vmatpush1.msra.mxu0 %v223
      %246 = vmatprep.subr.mxu0 0.0
      %247 = vmatpush1.msra.mxu0 %v224
      %248 = vmatprep.subr.mxu0 0.0
      %249 = vmatpush1.msra.mxu0 %v225
      %250 = vmatprep.subr.mxu0 0.0
      %251 = vmatpush1.msra.mxu0 %v226
      %252 = vmatprep.subr.mxu0 0.0
      %253 = vmatpush1.msra.mxu0 %v227
      %254 = vmatprep.subr.mxu0 0.0
      %255 = vmatpush1.msra.mxu0 %v228
      %256 = vmatprep.subr.mxu0 0.0
      %257 = vmatpush1.msra.mxu0 %v229
      %258 = vmatprep.subr.mxu0 0.0
      %259 = vmatpush1.msra.mxu0 %v230
      %260 = vmatprep.subr.mxu0 0.0
      %261 = vmatpush1.msra.mxu0 %v231
      %262 = vmatprep.subr.mxu0 0.0
      %263 = vmatpush1.msra.mxu0 %v232
      %264 = vmatprep.subr.mxu0 0.0
      %265 = vmatpush1.msra.mxu0 %v233
      %266 = vmatprep.subr.mxu0 0.0
      %267 = vmatpush1.msra.mxu0 %v234
      %268 = vmatprep.subr.mxu0 0.0
      %269 = vmatpush1.msra.mxu0 %v235
      %270 = vmatprep.subr.mxu0 0.0
      %271 = vmatpush1.msra.mxu0 0.0
      %272 = vmatprep.subr.mxu0 0.0
      %273 = vmatpush1.msra.mxu0 0.0
      %274 = vmatprep.subr.mxu0 0.0
      %275 = vmatpush1.msra.mxu0 0.0
      %276 = vmatprep.subr.mxu0 0.0
      %277 = vmatpush1.msra.mxu0 0.0
      %278 = vmatprep.subr.mxu0 0.0
      %279 = vmatpush1.msra.mxu0 0.0
      %280 = vmatprep.subr.mxu0 0.0
      %281 = vmatpush1.msra.mxu0 0.0
      %282 = vmatprep.subr.mxu0 0.0
      %283 = vmatpush1.msra.mxu0 0.0
      %284 = vmatprep.subr.mxu0 0.0
      %285 = vmatpush1.msra.mxu0 0.0
      %286 = vmatprep.subr.mxu0 0.0
      %287 = vmatpush1.msra.mxu0 0.0
      %288 = vmatprep.subr.mxu0 0.0
      %289 = vmatpush1.msra.mxu0 0.0
      %290 = vmatprep.subr.mxu0 0.0
      %291 = vmatpush1.msra.mxu0 0.0
      %292 = vmatprep.subr.mxu0 0.0
      %293 = vmatpush1.msra.mxu0 0.0
      %294 = vmatprep.subr.mxu0 0.0
      %295 = vmatpush1.msra.mxu0 0.0
      %296 = vmatprep.subr.mxu0 0.0
      %297 = vmatpush1.msra.mxu0 0.0
      %298 = vmatprep.subr.mxu0 0.0
      %299 = vmatpush1.msra.mxu0 0.0
      %300 = vmatprep.subr.mxu0 0.0
      %301 = vmatpush1.msra.mxu0 0.0
      %302 = vmatprep.mubr.f32.mxu0 0.0
      %303 = vmatmul.mubr.f32.gmra.mrb[0].mxu0 %v237
      %v304 = vpop.f32.mrb[0].mxu0
      %v305 = vadd.f32 0.0, %v304
      %v306 = vpop.f32.mrb[0].mxu0
      %307 = vdwg.mxu0
      %v308 = vadd.f32 %v236, %v305
      %309 = vst [vmem:[#allocation2] sm:$0xff] %v308
    $region33: #{tpu_custom_call.1} parent=1 // pred_fallthru
      _
    // Predicated region
    $region34: #{tpu_custom_call.1} parent=1 // pred_check
      %p310 = pneg %p41
    $region35: #{tpu_custom_call.1} parent=1 // pred_check_branch
      %312 = sbr.rel (%p310) target = $region37
    $region36: #{tpu_custom_call.1} parent=1 // pred_region
      %v313 = vld [vmem:[#allocation2] sm:$0xff]
      %v314 = vld [vmem:[%s2] sm:$0x1]
      %v316 = vlaneseq
      %v317 = vshrl.u32 %v316, 7
      %v318 = vsub.s32 0, %v317
      %v319 = vrot.slane %v314, %v318
      %v321 = vadd.f32 %v313, %v319
      %322 = vst [vmem:[#allocation8] sm:$0xff] %v321
    $region37: #{tpu_custom_call.1} parent=1 // pred_fallthru
      _
    // Predicated region
    $region38: #{tpu_custom_call.1} parent=1 // pred_check
      _
    $region39: #{tpu_custom_call.1} parent=1 // pred_check_branch
      %324 = sbr.rel (0) target = $region41
    $region40: #{tpu_custom_call.1} parent=1 // pred_region
      %s326 = ssub.s32 128, 128
      %327 = vsyncadd [#allocation5], %s326
      %s329 = sshll.u32 [#allocation8], 4
      %s330 = int_to_ptr.vmem [resolvable:$true] %s329
      %332 = dma.vmem_to_hbm [thread:$0]  %s330, 128, %s3, [#allocation5]
    $region41: #{tpu_custom_call.1} parent=1 // pred_fallthru
      _
    // Predicated region
    $region42: #{tpu_custom_call.1} parent=1 // pred_check
      _
    $region43: #{tpu_custom_call.1} parent=1 // pred_check_branch
      %334 = sbr.rel (0) target = $region45
    $region44: #{tpu_custom_call.1} parent=1 // pred_region
      %335 = dma.done [#allocation5], 128
    $region45: #{tpu_custom_call.1} parent=1 // pred_fallthru
      _
    %336 = vsyncpa [#allocation4], 1
    %337 = vsyncpa [#allocation7], 1
    %338 = vsyncpa [#allocation5], 1

</llo_original>
